<compile_context>
chip_gen: v7x
topology: tpu7x:2x2x1
jax: 0.10.0
libtpu: 0.0.40
codegen_flags: <defaults>
</compile_context>

<pallas_src>
import functools

import jax
import jax.numpy as jnp
import numpy as np
from jax import lax
from jax.experimental import pallas as pl
from jax.experimental.pallas import tpu as pltpu


def _composite_body(composition,
                    params_ref, x1oh_ref, x2oh_ref, x1e_ref, x2e_ref, x2sq_ref,
                    out_ref):
    """One (row_tile, col_tile) tile of the composite Gram matrix.

    params (SMEM, float32[4]):
      [0] w0_eff = outputscale * weight * exp(-gamma)   (structure / product scale)
      [1] w1     = sequence-kernel weight (weighted_sum / add; unused for multiply)
      [2] b      = gamma / L
      [3] inv    = 1 / (2 * lengthscale_seq^2)
    """
    # ---- structure kernel: match counts via bf16 one-hot matmul, f32 accumulation ----
    matches = lax.dot_general(
        x1oh_ref[...], x2oh_ref[...],
        dimension_numbers=(((1,), (1,)), ((), ())),
        preferred_element_type=jnp.float32)                      # (tm, tc), exact ints <= L

    # ---- sequence kernel: RBF squared distance on embeddings ----
    x1e = x1e_ref[...]
    cross = lax.dot_general(
        x1e, x2e_ref[...],
        dimension_numbers=(((1,), (1,)), ((), ())),
        preferred_element_type=jnp.float32)                      # (tm, tc)
    x1sq = jnp.sum(x1e * x1e, axis=-1, keepdims=True)            # (tm, 1)  (tile-local, cheap)
    d2 = jnp.maximum(x1sq + x2sq_ref[...] - 2.0 * cross, 0.0)    # x2sq is (1, tc): free broadcast

    w0 = params_ref[0]
    w1 = params_ref[1]
    b = params_ref[2]
    inv = params_ref[3]

    if composition == "multiply":
        # ScaleKernel(k_struct * k_seq) with the two exponentials fused into one EUP exp.
        k = w0 * jnp.exp(b * matches - d2 * inv)
    else:  # "weighted_sum" / "add" (weights already folded into w0/w1)
        k = w0 * jnp.exp(b * matches) + w1 * jnp.exp(-d2 * inv)
    out_ref[...] = k.astype(out_ref.dtype)


# Deterministic synthetic hyper-parameters (the module's learnable params).
_HYPERS = dict(
    pi=0.5,                  # torch.nn.Parameter(torch.tensor(0.5))
    outputscale_struct=1.3,  # ScaleKernel on the structure kernel
    outputscale_seq=0.7,     # ScaleKernel on the sequence kernel (add mode)
    outputscale_prod=1.1,    # ScaleKernel on the product (multiply mode)
    gamma_struct=2.0,        # structure-kernel lengthscale
    lengthscale_seq=4.0,     # RBF lengthscale for the sequence kernel
)


def composite_kernel(x1, x2=None, *, vocab_size=20, composition="weighted_sum",
                     row_tile=128, col_tile=128, **hypers):
    """JAX/Pallas equivalent of CompositeKernel.forward.

    x1, x2: tuples (tokens int32 (N, L), embeddings float32 (N, D)).
    Returns the (N1, N2) float32 Gram matrix.
    """
    h = dict(_HYPERS, **hypers)
    if x2 is None:
        x2 = x1
    x1_toks, x1_emb = x1
    x2_toks, x2_emb = x2
    n1, L = x1_toks.shape
    n2 = x2_toks.shape[0]
    d = x1_emb.shape[-1]
    lv = L * vocab_size

    # cdiv-based grid with zero padding (no divisibility assert).
    n1p = row_tile * pl.cdiv(n1, row_tile)
    n2p = col_tile * pl.cdiv(n2, col_tile)

    # One-hot in bf16: values are exactly 0/1; f32 accumulation keeps counts exact.
    x1_oh = jax.nn.one_hot(x1_toks, vocab_size, dtype=jnp.bfloat16).reshape(n1, lv)
    x2_oh = jax.nn.one_hot(x2_toks, vocab_size, dtype=jnp.bfloat16).reshape(n2, lv)
    x1_emb = x1_emb.astype(jnp.float32)
    x2_emb = x2_emb.astype(jnp.float32)

    def _pad_rows(a, n_to):
        pad = n_to - a.shape[0]
        return jnp.pad(a, ((0, pad), (0, 0))) if pad else a

    x1_oh = _pad_rows(x1_oh, n1p)
    x2_oh = _pad_rows(x2_oh, n2p)
    x1_emb_p = _pad_rows(x1_emb, n1p)
    x2_emb_p = _pad_rows(x2_emb, n2p)

    # Hoisted x2 squared norms, as a lane-major (1, n2p) row vector tiled with the N2 axis.
    x2sq = jnp.sum(x2_emb_p * x2_emb_p, axis=-1)[None, :]

    # ---- scalar hyper-parameter folding ----
    sig_pi = jax.nn.sigmoid(jnp.float32(h["pi"]))
    gamma = jnp.float32(h["gamma_struct"])
    if composition == "weighted_sum":
        w0 = jnp.float32(h["outputscale_struct"]) * sig_pi
        w1 = jnp.float32(1.0) - sig_pi
    elif composition == "add":
        w0 = jnp.float32(h["outputscale_struct"])
        w1 = jnp.float32(h["outputscale_seq"])
    elif composition == "multiply":
        w0 = jnp.float32(h["outputscale_prod"])
        w1 = jnp.float32(0.0)
    else:
        raise ValueError(composition)
    w0_eff = w0 * jnp.exp(-gamma)                       # fold exp(-gamma) into the scale
    params = jnp.stack(
        [w0_eff, w1, gamma / jnp.float32(L),
         jnp.float32(1.0 / (2.0 * h["lengthscale_seq"] ** 2))]).astype(jnp.float32)

    grid = (n1p // row_tile, n2p // col_tile)
    n_trans = 1 if composition == "multiply" else 2
    cost = pl.CostEstimate(
        flops=2 * n1p * n2p * (lv + d),
        transcendentals=n_trans * n1p * n2p,
        bytes_accessed=(x1_oh.size * 2 * grid[1] + x2_oh.size * 2 * grid[0]
                        + x1_emb_p.size * 4 * grid[1] + x2_emb_p.size * 4 * grid[0]
                        + x2sq.size * 4 * grid[0] + n1p * n2p * 4),
    )

    body = functools.partial(_composite_body, composition)
    out = pl.pallas_call(
        body,
        out_shape=jax.ShapeDtypeStruct((n1p, n2p), jnp.float32),
        grid_spec=pltpu.PrefetchScalarGridSpec(
            num_scalar_prefetch=0,
            grid=grid,
            in_specs=[
                pl.BlockSpec(memory_space=pltpu.MemorySpace.SMEM),        # params (scalars)
                pl.BlockSpec((row_tile, lv), lambda i, j: (i, 0)),        # x1 one-hot row tile
                pl.BlockSpec((col_tile, lv), lambda i, j: (j, 0)),        # x2 one-hot col tile
                pl.BlockSpec((row_tile, d), lambda i, j: (i, 0)),         # x1 emb row tile
                pl.BlockSpec((col_tile, d), lambda i, j: (j, 0)),         # x2 emb col tile
                pl.BlockSpec((1, col_tile), lambda i, j: (0, j)),         # x2 squared norms
            ],
            out_specs=pl.BlockSpec((row_tile, col_tile), lambda i, j: (i, j)),
        ),
        compiler_params=pltpu.CompilerParams(
            dimension_semantics=("parallel", "parallel"),
            vmem_limit_bytes=48 * 1024 * 1024),
        cost_estimate=cost,
    )(params, x1_oh, x2_oh, x1_emb_p, x2_emb_p, x2sq)
    return out[:n1, :n2]


def _reference(x1, x2, composition):
    """Pure-JAX reference of the same forward semantics."""
    h = _HYPERS
    x1_toks, x1_emb = x1
    x2_toks, x2_emb = x2
    L = x1_toks.shape[-1]
    matches = jnp.sum(
        x1_toks[:, None, :] == x2_toks[None, :, :], axis=-1).astype(jnp.float32)
    k_struct = jnp.exp(-h["gamma_struct"] * (L - matches) / L)
    d2 = jnp.sum((x1_emb[:, None, :] - x2_emb[None, :, :]) ** 2, axis=-1)
    k_seq = jnp.exp(-d2 / (2.0 * h["lengthscale_seq"] ** 2))
    sig = jax.nn.sigmoid(jnp.float32(h["pi"]))
    if composition == "weighted_sum":
        return h["outputscale_struct"] * k_struct * sig + k_seq * (1.0 - sig)
    if composition == "add":
        return h["outputscale_struct"] * k_struct + h["outputscale_seq"] * k_seq
    return h["outputscale_prod"] * (k_struct * k_seq)


if __name__ == "__main__":
    key = jax.random.PRNGKey(0)
    k1, k2, k3, k4 = jax.random.split(key, 4)
    N1, N2, L, V, D = 16, 8, 8, 20, 32

    x1_toks = jax.random.randint(k1, (N1, L), 0, V, dtype=jnp.int32)
    x2_toks = jax.random.randint(k2, (N2, L), 0, V, dtype=jnp.int32)
    x1_emb = jax.random.normal(k3, (N1, D), dtype=jnp.float32)
    x2_emb = jax.random.normal(k4, (N2, D), dtype=jnp.float32)

    x1 = (x1_toks, x1_emb)
    x2 = (x2_toks, x2_emb)

    outs = {}
    for comp in ("weighted_sum", "add", "multiply"):
        outs[comp] = composite_kernel(x1, x2, composition=comp)
    # x2=None path (self Gram matrix), like the PyTorch forward default.
    out_self = composite_kernel((x1_toks[:8], x1_emb[:8]))
    jax.block_until_ready((outs, out_self))

    for comp, out in outs.items():
        ref = _reference(x1, x2, comp)
        np.testing.assert_allclose(np.asarray(out), np.asarray(ref),
                                   rtol=2e-2, atol=2e-2)
    ref_self = _reference((x1_toks[:8], x1_emb[:8]), (x1_toks[:8], x1_emb[:8]),
                          "weighted_sum")
    np.testing.assert_allclose(np.asarray(out_self), np.asarray(ref_self),
                               rtol=2e-2, atol=2e-2)

    print("KERNEL_OK")
</pallas_src>

<mosaic_0001>
module attributes {stable_mosaic.version = 11 : i64} {
  func.func @_composite_body(%arg0: i32, %arg1: i32, %arg2: memref<4xf32, #tpu.memory_space<smem>>, %arg3: memref<128x160xbf16, #tpu.memory_space<vmem>>, %arg4: memref<128x160xbf16, #tpu.memory_space<vmem>>, %arg5: memref<128x32xf32, #tpu.memory_space<vmem>>, %arg6: memref<128x32xf32, #tpu.memory_space<vmem>>, %arg7: memref<1x128xf32, #tpu.memory_space<vmem>>, %arg8: memref<128x128xf32, #tpu.memory_space<vmem>>) attributes {dimension_semantics = [#tpu.dimension_semantics<parallel>, #tpu.dimension_semantics<parallel>], iteration_bounds = array<i64: 1, 1>, scalar_prefetch = 0 : i64, scratch_operands = 0 : i64, tpu.core_type = #tpu.core_type<tc>, window_params = [{transform_indices = @transform_0, window_bounds = array<i64: 4>}, {transform_indices = @transform_1, window_bounds = array<i64: 128, 160>}, {transform_indices = @transform_2, window_bounds = array<i64: 128, 160>}, {transform_indices = @transform_3, window_bounds = array<i64: 128, 32>}, {transform_indices = @transform_4, window_bounds = array<i64: 128, 32>}, {transform_indices = @transform_5, window_bounds = array<i64: 1, 128>}, {transform_indices = @transform_6, window_bounds = array<i64: 128, 128>}]} {
    %c0 = arith.constant 0 : index
    %c0_0 = arith.constant 0 : index
    %0 = vector.load %arg3[%c0, %c0_0] : memref<128x160xbf16, #tpu.memory_space<vmem>>, vector<128x160xbf16>
    %c0_1 = arith.constant 0 : index
    %c0_2 = arith.constant 0 : index
    %1 = vector.load %arg4[%c0_1, %c0_2] : memref<128x160xbf16, #tpu.memory_space<vmem>>, vector<128x160xbf16>
    %cst = arith.constant dense<0.000000e+00> : vector<128x128xf32>
    %2 = tpu.matmul %0, %1, %cst {dimension_numbers = #tpu.dot_dimension_numbers<[1], [1], [0], [0], [0, 0, 1, 0], [], []>} : vector<128x160xbf16>, vector<128x160xbf16>, vector<128x128xf32> -> vector<128x128xf32>
    %c0_3 = arith.constant 0 : index
    %c0_4 = arith.constant 0 : index
    %3 = vector.load %arg5[%c0_3, %c0_4] : memref<128x32xf32, #tpu.memory_space<vmem>>, vector<128x32xf32>
    %c0_5 = arith.constant 0 : index
    %c0_6 = arith.constant 0 : index
    %4 = vector.load %arg6[%c0_5, %c0_6] : memref<128x32xf32, #tpu.memory_space<vmem>>, vector<128x32xf32>
    %cst_7 = arith.constant dense<0.000000e+00> : vector<128x128xf32>
    %5 = tpu.matmul %3, %4, %cst_7 {dimension_numbers = #tpu.dot_dimension_numbers<[1], [1], [0], [0], [0, 0, 1, 0], [], []>} : vector<128x32xf32>, vector<128x32xf32>, vector<128x128xf32> -> vector<128x128xf32>
    %6 = arith.mulf %3, %3 : vector<128x32xf32>
    %cst_8 = arith.constant dense<0.000000e+00> : vector<128xf32>
    %7 = vector.multi_reduction <add>, %6, %cst_8 [1] : vector<128x32xf32> to vector<128xf32>
    %8 = vector.shape_cast %7 : vector<128xf32> to vector<128x1xf32>
    %c0_9 = arith.constant 0 : index
    %c0_10 = arith.constant 0 : index
    %9 = vector.load %arg7[%c0_9, %c0_10] : memref<1x128xf32, #tpu.memory_space<vmem>>, vector<1x128xf32>
    %10 = vector.broadcast %8 : vector<128x1xf32> to vector<128x128xf32>
    %11 = vector.broadcast %9 : vector<1x128xf32> to vector<128x128xf32>
    %12 = arith.addf %10, %11 : vector<128x128xf32>
    %cst_11 = arith.constant 2.000000e+00 : f32
    %13 = vector.broadcast %cst_11 : f32 to vector<128x128xf32>
    %14 = arith.mulf %13, %5 : vector<128x128xf32>
    %15 = arith.subf %12, %14 : vector<128x128xf32>
    %cst_12 = arith.constant 0.000000e+00 : f32
    %16 = vector.broadcast %cst_12 : f32 to vector<128x128xf32>
    %17 = arith.maximumf %15, %16 : vector<128x128xf32>
    %c0_13 = arith.constant 0 : index
    %18 = memref.load %arg2[%c0_13] : memref<4xf32, #tpu.memory_space<smem>>
    %c1 = arith.constant 1 : index
    %19 = memref.load %arg2[%c1] : memref<4xf32, #tpu.memory_space<smem>>
    %c2 = arith.constant 2 : index
    %20 = memref.load %arg2[%c2] : memref<4xf32, #tpu.memory_space<smem>>
    %c3 = arith.constant 3 : index
    %21 = memref.load %arg2[%c3] : memref<4xf32, #tpu.memory_space<smem>>
    %22 = vector.broadcast %20 : f32 to vector<128x128xf32>
    %23 = arith.mulf %22, %2 : vector<128x128xf32>
    %24 = math.exp %23 : vector<128x128xf32>
    %25 = vector.broadcast %18 : f32 to vector<128x128xf32>
    %26 = arith.mulf %25, %24 : vector<128x128xf32>
    %cst_14 = arith.constant 0.000000e+00 : f32
    %27 = vector.broadcast %cst_14 : f32 to vector<128x128xf32>
    %28 = arith.subf %27, %17 : vector<128x128xf32>
    %29 = vector.broadcast %21 : f32 to vector<128x128xf32>
    %30 = arith.mulf %28, %29 : vector<128x128xf32>
    %31 = math.exp %30 : vector<128x128xf32>
    %32 = vector.broadcast %19 : f32 to vector<128x128xf32>
    %33 = arith.mulf %32, %31 : vector<128x128xf32>
    %34 = arith.addf %26, %33 : vector<128x128xf32>
    %c0_15 = arith.constant 0 : index
    %c0_16 = arith.constant 0 : index
    %35 = vector.load %arg8[%c0_15, %c0_16] : memref<128x128xf32, #tpu.memory_space<vmem>>, vector<128x128xf32>
    tpu.vector_store %arg8[%c0_15, %c0_16], %34 {strides = array<i32>} : memref<128x128xf32, #tpu.memory_space<vmem>>, vector<128x128xf32>,
    return
  }
  func.func @transform_0(%arg0: i32, %arg1: i32) -> i32 {
    %c0_i32 = arith.constant 0 : i32
    %c0_i32_0 = arith.constant 0 : i32
    return %c0_i32 : i32
  }
  func.func @transform_1(%arg0: i32, %arg1: i32) -> (i32, i32) {
    %c0_i32 = arith.constant 0 : i32
    %c0_i32_0 = arith.constant 0 : i32
    return %arg0, %c0_i32 : i32, i32
  }
  func.func @transform_2(%arg0: i32, %arg1: i32) -> (i32, i32) {
    %c0_i32 = arith.constant 0 : i32
    %c0_i32_0 = arith.constant 0 : i32
    return %arg1, %c0_i32 : i32, i32
  }
  func.func @transform_3(%arg0: i32, %arg1: i32) -> (i32, i32) {
    %c0_i32 = arith.constant 0 : i32
    %c0_i32_0 = arith.constant 0 : i32
    return %arg0, %c0_i32 : i32, i32
  }
  func.func @transform_4(%arg0: i32, %arg1: i32) -> (i32, i32) {
    %c0_i32 = arith.constant 0 : i32
    %c0_i32_0 = arith.constant 0 : i32
    return %arg1, %c0_i32 : i32, i32
  }
  func.func @transform_5(%arg0: i32, %arg1: i32) -> (i32, i32) {
    %c0_i32 = arith.constant 0 : i32
    %c0_i32_0 = arith.constant 0 : i32
    return %c0_i32, %arg1 : i32, i32
  }
  func.func @transform_6(%arg0: i32, %arg1: i32) -> (i32, i32) {
    %c0_i32 = arith.constant 0 : i32
    return %arg0, %arg1 : i32, i32
  }
}

</mosaic_0001>

<llo_original>
// kernel: tpu_custom_call.1
$region0: #{tpu_custom_call.1}
  #allocation0 [shape = 'u32[]', space=smem, size = 0x4, offset = 0x4, fixed_abs, tag = 'smem constant byte address 0x4 - core index']
  #allocation1 [shape = 'u32[144,128]{1,0:T(1,128)}', space=vmem, size = 0x12000, scoped, tag = 'internal scratch']
  %s0 = inlined_call_operand.vmem [shape: f32[4], index: 0, kind: input, shape index: {}]
  %s1 = inlined_call_operand.vmem [shape: bf16[128,160], index: 1, kind: input, shape index: {}]
  %s2 = inlined_call_operand.vmem [shape: bf16[128,160], index: 2, kind: input, shape index: {}]
  %s3 = inlined_call_operand.vmem [shape: f32[128,32], index: 3, kind: input, shape index: {}]
  %s4 = inlined_call_operand.vmem [shape: f32[128,32], index: 4, kind: input, shape index: {}]
  %s5 = inlined_call_operand.vmem [shape: f32[1,128], index: 5, kind: input, shape index: {}]
  %s6 = inlined_call_operand.hbm [shape: f32[128,128], index: 6, kind: output, shape index: {}]
  %s7 = sld [smem:[#allocation0]]
  $region38: #{tpu_custom_call.1} parent=0
    _
  %s9 = ssub.s32 1, %s7
  %s10 = scalar_select 0, %s9, %s7
  $region1: #{tpu_custom_call.1} parent=0
    #allocation2 [shape = 'u8[512]{0}', space=smem, size = 0x200, scoped, tag = 'input window, operand 0, single buffered']
    #allocation3 [shape = 's32[1]{0}', space=sflag, size = 0x4, scoped, tag = 'scoped memory for tpu_custom_call.1']
    #allocation4 [shape = 's32[1]{0}', space=sflag, size = 0x4, scoped, tag = 'scoped memory for tpu_custom_call.1']
    #allocation5 [shape = 'u8[65536]{0}', space=vmem, size = 0x10000, scoped, tag = 'output window, operand 0, single buffered']
    %11 = vsyncpa [#allocation4], 0
    %12 = vsyncpa [#allocation3], 0
    // Predicated region
    $region2: #{tpu_custom_call.1} parent=1 // pred_check
      _
    $region3: #{tpu_custom_call.1} parent=1 // pred_check_branch
      %14 = sbr.rel (0) target = $region5
    $region4: #{tpu_custom_call.1} parent=1 // pred_region
      %s16 = ssub.s32 16, 16
      %17 = vsyncadd [#allocation4], %s16
      %s19 = sshll.u32 %s0, 4
      %s20 = int_to_ptr.vmem [resolvable:$true] %s19
      %22 = dma.vmem_to_smem %s20, 16, [#allocation2], [#allocation4]
    $region5: #{tpu_custom_call.1} parent=1 // pred_fallthru
      _
    // Predicated region
    $region6: #{tpu_custom_call.1} parent=1 // pred_check
      _
    $region7: #{tpu_custom_call.1} parent=1 // pred_check_branch
      %24 = sbr.rel (0) target = $region9
    $region8: #{tpu_custom_call.1} parent=1 // pred_region
      _
    $region9: #{tpu_custom_call.1} parent=1 // pred_fallthru
      _
    // Predicated region
    $region10: #{tpu_custom_call.1} parent=1 // pred_check
      _
    $region11: #{tpu_custom_call.1} parent=1 // pred_check_branch
      %26 = sbr.rel (0) target = $region13
    $region12: #{tpu_custom_call.1} parent=1 // pred_region
      _
    $region13: #{tpu_custom_call.1} parent=1 // pred_fallthru
      _
    // Predicated region
    $region14: #{tpu_custom_call.1} parent=1 // pred_check
      _
    $region15: #{tpu_custom_call.1} parent=1 // pred_check_branch
      %28 = sbr.rel (0) target = $region17
    $region16: #{tpu_custom_call.1} parent=1 // pred_region
      _
    $region17: #{tpu_custom_call.1} parent=1 // pred_fallthru
      _
    // Predicated region
    $region18: #{tpu_custom_call.1} parent=1 // pred_check
      _
    $region19: #{tpu_custom_call.1} parent=1 // pred_check_branch
      %30 = sbr.rel (0) target = $region21
    $region20: #{tpu_custom_call.1} parent=1 // pred_region
      _
    $region21: #{tpu_custom_call.1} parent=1 // pred_fallthru
      _
    // Predicated region
    $region22: #{tpu_custom_call.1} parent=1 // pred_check
      _
    $region23: #{tpu_custom_call.1} parent=1 // pred_check_branch
      %32 = sbr.rel (0) target = $region25
    $region24: #{tpu_custom_call.1} parent=1 // pred_region
      _
    $region25: #{tpu_custom_call.1} parent=1 // pred_fallthru
      _
    // Predicated region
    $region26: #{tpu_custom_call.1} parent=1 // pred_check
      _
    $region27: #{tpu_custom_call.1} parent=1 // pred_check_branch
      %34 = sbr.rel (0) target = $region29
    $region28: #{tpu_custom_call.1} parent=1 // pred_region
      %35 = dma.done [#allocation4], 16
    $region29: #{tpu_custom_call.1} parent=1 // pred_fallthru
      _
    %36 = sfence
    %v38 = vld [vmem:[%s1] sm:$0xff]
    %v39 = vld [vmem:[%s1 + $0x8] sm:$0xff]
    %v40 = vld [vmem:[%s1 + $0x10] sm:$0xff]
    %v41 = vld [vmem:[%s1 + $0x18] sm:$0xff]
    %v42 = vld [vmem:[%s1 + $0x20] sm:$0xff]
    %v43 = vld [vmem:[%s1 + $0x28] sm:$0xff]
    %v44 = vld [vmem:[%s1 + $0x30] sm:$0xff]
    %v45 = vld [vmem:[%s1 + $0x38] sm:$0xff]
    %v46 = vld [vmem:[%s1 + $0x40] sm:$0xff]
    %v47 = vld [vmem:[%s1 + $0x48] sm:$0xff]
    %v48 = vld [vmem:[%s1 + $0x50] sm:$0xff]
    %v49 = vld [vmem:[%s1 + $0x58] sm:$0xff]
    %v50 = vld [vmem:[%s1 + $0x60] sm:$0xff]
    %v51 = vld [vmem:[%s1 + $0x68] sm:$0xff]
    %v52 = vld [vmem:[%s1 + $0x70] sm:$0xff]
    %v53 = vld [vmem:[%s1 + $0x78] sm:$0xff]
    %v54 = vld [vmem:[%s2] sm:$0xff]
    %v55 = vld [vmem:[%s2 + $0x8] sm:$0xff]
    %v56 = vld [vmem:[%s2 + $0x10] sm:$0xff]
    %v57 = vld [vmem:[%s2 + $0x18] sm:$0xff]
    %v58 = vld [vmem:[%s2 + $0x20] sm:$0xff]
    %v59 = vld [vmem:[%s2 + $0x28] sm:$0xff]
    %v60 = vld [vmem:[%s2 + $0x30] sm:$0xff]
    %v61 = vld [vmem:[%s2 + $0x38] sm:$0xff]
    %v62 = vld [vmem:[%s2 + $0x40] sm:$0xff]
    %v63 = vld [vmem:[%s2 + $0x48] sm:$0xff]
    %v64 = vld [vmem:[%s2 + $0x50] sm:$0xff]
    %v65 = vld [vmem:[%s2 + $0x58] sm:$0xff]
    %v66 = vld [vmem:[%s2 + $0x60] sm:$0xff]
    %v67 = vld [vmem:[%s2 + $0x68] sm:$0xff]
    %v68 = vld [vmem:[%s2 + $0x70] sm:$0xff]
    %v69 = vld [vmem:[%s2 + $0x78] sm:$0xff]
    %v86 = vunpack.c.l.b16 %v38
    %v87 = vunpack.c.h.b16 %v38
    %v88 = vunpack.c.l.b16 %v39
    %v89 = vunpack.c.h.b16 %v39
    %v90 = vunpack.c.l.b16 %v40
    %v91 = vunpack.c.h.b16 %v40
    %v92 = vunpack.c.l.b16 %v41
    %v93 = vunpack.c.h.b16 %v41
    %v94 = vunpack.c.l.b16 %v42
    %v95 = vunpack.c.h.b16 %v42
    %v96 = vunpack.c.l.b16 %v43
    %v97 = vunpack.c.h.b16 %v43
    %v98 = vunpack.c.l.b16 %v44
    %v99 = vunpack.c.h.b16 %v44
    %v100 = vunpack.c.l.b16 %v45
    %v101 = vunpack.c.h.b16 %v45
    %v102 = vunpack.c.l.b16 %v46
    %v103 = vunpack.c.h.b16 %v46
    %v104 = vunpack.c.l.b16 %v47
    %v105 = vunpack.c.h.b16 %v47
    %v106 = vunpack.c.l.b16 %v48
    %v107 = vunpack.c.h.b16 %v48
    %v108 = vunpack.c.l.b16 %v49
    %v109 = vunpack.c.h.b16 %v49
    %v110 = vunpack.c.l.b16 %v50
    %v111 = vunpack.c.h.b16 %v50
    %v112 = vunpack.c.l.b16 %v51
    %v113 = vunpack.c.h.b16 %v51
    %v114 = vunpack.c.l.b16 %v52
    %v115 = vunpack.c.h.b16 %v52
    %v116 = vunpack.c.l.b16 %v53
    %v117 = vunpack.c.h.b16 %v53
    %v118 = vpack.c.b16 %v88, %v86
    %v119 = vpack.c.b16 %v89, %v87
    %v120 = vpack.c.b16 %v92, %v90
    %v121 = vpack.c.b16 %v93, %v91
    %v122 = vpack.c.b16 %v96, %v94
    %v123 = vpack.c.b16 %v97, %v95
    %v124 = vpack.c.b16 %v100, %v98
    %v125 = vpack.c.b16 %v101, %v99
    %v126 = vpack.c.b16 %v104, %v102
    %v127 = vpack.c.b16 %v105, %v103
    %v128 = vpack.c.b16 %v108, %v106
    %v129 = vpack.c.b16 %v109, %v107
    %v130 = vpack.c.b16 %v112, %v110
    %v131 = vpack.c.b16 %v113, %v111
    %v132 = vpack.c.b16 %v116, %v114
    %v133 = vpack.c.b16 %v117, %v115
    %v158 = vunpack.c.l.b16 %v54
    %v159 = vunpack.c.h.b16 %v54
    %v160 = vunpack.c.l.b16 %v55
    %v161 = vunpack.c.h.b16 %v55
    %v162 = vunpack.c.l.b16 %v56
    %v163 = vunpack.c.h.b16 %v56
    %v164 = vunpack.c.l.b16 %v57
    %v165 = vunpack.c.h.b16 %v57
    %v166 = vunpack.c.l.b16 %v58
    %v167 = vunpack.c.h.b16 %v58
    %v168 = vunpack.c.l.b16 %v59
    %v169 = vunpack.c.h.b16 %v59
    %v170 = vunpack.c.l.b16 %v60
    %v171 = vunpack.c.h.b16 %v60
    %v172 = vunpack.c.l.b16 %v61
    %v173 = vunpack.c.h.b16 %v61
    %v174 = vunpack.c.l.b16 %v62
    %v175 = vunpack.c.h.b16 %v62
    %v176 = vunpack.c.l.b16 %v63
    %v177 = vunpack.c.h.b16 %v63
    %v178 = vunpack.c.l.b16 %v64
    %v179 = vunpack.c.h.b16 %v64
    %v180 = vunpack.c.l.b16 %v65
    %v181 = vunpack.c.h.b16 %v65
    %v182 = vunpack.c.l.b16 %v66
    %v183 = vunpack.c.h.b16 %v66
    %v184 = vunpack.c.l.b16 %v67
    %v185 = vunpack.c.h.b16 %v67
    %v186 = vunpack.c.l.b16 %v68
    %v187 = vunpack.c.h.b16 %v68
    %v188 = vunpack.c.l.b16 %v69
    %v189 = vunpack.c.h.b16 %v69
    %v190 = vpack.c.b16 %v160, %v158
    %v191 = vpack.c.b16 %v161, %v159
    %v192 = vpack.c.b16 %v164, %v162
    %v193 = vpack.c.b16 %v165, %v163
    %v194 = vpack.c.b16 %v168, %v166
    %v195 = vpack.c.b16 %v169, %v167
    %v196 = vpack.c.b16 %v172, %v170
    %v197 = vpack.c.b16 %v173, %v171
    %v198 = vpack.c.b16 %v176, %v174
    %v199 = vpack.c.b16 %v177, %v175
    %v200 = vpack.c.b16 %v180, %v178
    %v201 = vpack.c.b16 %v181, %v179
    %v202 = vpack.c.b16 %v184, %v182
    %v203 = vpack.c.b16 %v185, %v183
    %v204 = vpack.c.b16 %v188, %v186
    %v205 = vpack.c.b16 %v189, %v187
    %vm214 = vcmask 261120
    %v216 = vsel %vm214, %v119, 0
    %v219 = vsel %vm214, %v121, 0
    %v222 = vsel %vm214, %v123, 0
    %v225 = vsel %vm214, %v125, 0
    %v228 = vsel %vm214, %v127, 0
    %v231 = vsel %vm214, %v129, 0
    %v234 = vsel %vm214, %v131, 0
    %v237 = vsel %vm214, %v133, 0
    %v240 = vsel %vm214, %v191, 0
    %v243 = vsel %vm214, %v193, 0
    %v246 = vsel %vm214, %v195, 0
    %v249 = vsel %vm214, %v197, 0
    %v252 = vsel %vm214, %v199, 0
    %v255 = vsel %vm214, %v201, 0
    %v258 = vsel %vm214, %v203, 0
    %v261 = vsel %vm214, %v205, 0
    %263 = vmatprep.subr.bf16.mxu0 %v240
    %264 = vmatpush1.bf16.xpose.msra.mxu0 %v190
    %265 = vmatprep.subr.bf16.mxu0 %v243
    %266 = vmatpush1.bf16.xpose.msra.mxu0 %v192
    %267 = vmatprep.subr.bf16.mxu0 %v246
    %268 = vmatpush1.bf16.xpose.msra.mxu0 %v194
    %269 = vmatprep.subr.bf16.mxu0 %v249
    %270 = vmatpush1.bf16.xpose.msra.mxu0 %v196
    %271 = vmatprep.subr.bf16.mxu0 %v252
    %272 = vmatpush1.bf16.xpose.msra.mxu0 %v198
    %273 = vmatprep.subr.bf16.mxu0 %v255
    %274 = vmatpush1.bf16.xpose.msra.mxu0 %v200
    %275 = vmatprep.subr.bf16.mxu0 %v258
    %276 = vmatpush1.bf16.xpose.msra.mxu0 %v202
    %277 = vmatprep.subr.bf16.mxu0 %v261
    %278 = vmatpush1.bf16.xpose.msra.mxu0 %v204
    %279 = vmatprep.subr.bf16.mxu0 0
    %280 = vmatpush1.bf16.xpose.msra.mxu0 0
    %281 = vmatprep.subr.bf16.mxu0 0
    %282 = vmatpush1.bf16.xpose.msra.mxu0 0
    %283 = vmatprep.subr.bf16.mxu0 0
    %284 = vmatpush1.bf16.xpose.msra.mxu0 0
    %285 = vmatprep.subr.bf16.mxu0 0
    %286 = vmatpush1.bf16.xpose.msra.mxu0 0
    %287 = vmatprep.subr.bf16.mxu0 0
    %288 = vmatpush1.bf16.xpose.msra.mxu0 0
    %289 = vmatprep.subr.bf16.mxu0 0
    %290 = vmatpush1.bf16.xpose.msra.mxu0 0
    %291 = vmatprep.subr.bf16.mxu0 0
    %292 = vmatpush1.bf16.xpose.msra.mxu0 0
    %293 = vmatprep.subr.bf16.mxu0 0
    %294 = vmatpush1.bf16.xpose.msra.mxu0 0
    %295 = vmatprep.mubr.bf16.mxu0 %v216
    %296 = vmatmul.mubr.bf16.gmra.mrb[0].mxu0 %v118
    %v297 = vpop.f32.mrb[0].mxu0
    %v298 = vadd.f32 0.0, %v297
    %v299 = vpop.f32.mrb[0].mxu0
    %v300 = vpop.f32.mrb[0].mxu0
    %v301 = vadd.f32 0.0, %v300
    %v302 = vpop.f32.mrb[0].mxu0
    %303 = vmatprep.mubr.bf16.mxu0 %v219
    %304 = vmatmul.mubr.bf16.gmra.mrb[0].mxu0 %v120
    %v305 = vpop.f32.mrb[0].mxu0
    %v306 = vadd.f32 0.0, %v305
    %v307 = vpop.f32.mrb[0].mxu0
    %v308 = vpop.f32.mrb[0].mxu0
    %v309 = vadd.f32 0.0, %v308
    %v310 = vpop.f32.mrb[0].mxu0
    %311 = vmatprep.mubr.bf16.mxu0 %v222
    %312 = vmatmul.mubr.bf16.gmra.mrb[0].mxu0 %v122
    %v313 = vpop.f32.mrb[0].mxu0
    %v314 = vadd.f32 0.0, %v313
    %v315 = vpop.f32.mrb[0].mxu0
    %v316 = vpop.f32.mrb[0].mxu0
    %v317 = vadd.f32 0.0, %v316
    %v318 = vpop.f32.mrb[0].mxu0
    %319 = vmatprep.mubr.bf16.mxu0 %v225
    %320 = vmatmul.mubr.bf16.gmra.mrb[0].mxu0 %v124
    %v321 = vpop.f32.mrb[0].mxu0
    %v322 = vadd.f32 0.0, %v321
    %v323 = vpop.f32.mrb[0].mxu0
    %v324 = vpop.f32.mrb[0].mxu0
    %v325 = vadd.f32 0.0, %v324
    %v326 = vpop.f32.mrb[0].mxu0
    %327 = vmatprep.mubr.bf16.mxu0 %v228
    %328 = vmatmul.mubr.bf16.gmra.mrb[0].mxu0 %v126
    %v329 = vpop.f32.mrb[0].mxu0
    %v330 = vadd.f32 0.0, %v329
    %v331 = vpop.f32.mrb[0].mxu0
    %v332 = vpop.f32.mrb[0].mxu0
    %v333 = vadd.f32 0.0, %v332
    %v334 = vpop.f32.mrb[0].mxu0
    %335 = vmatprep.mubr.bf16.mxu0 %v231
    %336 = vmatmul.mubr.bf16.gmra.mrb[0].mxu0 %v128
    %v337 = vpop.f32.mrb[0].mxu0
    %v338 = vadd.f32 0.0, %v337
    %v339 = vpop.f32.mrb[0].mxu0
    %v340 = vpop.f32.mrb[0].mxu0
    %v341 = vadd.f32 0.0, %v340
    %v342 = vpop.f32.mrb[0].mxu0
    %343 = vmatprep.mubr.bf16.mxu0 %v234
    %344 = vmatmul.mubr.bf16.gmra.mrb[0].mxu0 %v130
    %v345 = vpop.f32.mrb[0].mxu0
    %v346 = vadd.f32 0.0, %v345
    %v347 = vpop.f32.mrb[0].mxu0
    %v348 = vpop.f32.mrb[0].mxu0
    %v349 = vadd.f32 0.0, %v348
    %v350 = vpop.f32.mrb[0].mxu0
    %351 = vmatprep.mubr.bf16.mxu0 %v237
    %352 = vmatmul.mubr.bf16.gmra.mrb[0].mxu0 %v132
    %v353 = vpop.f32.mrb[0].mxu0
    %v354 = vadd.f32 0.0, %v353
    %v355 = vpop.f32.mrb[0].mxu0
    %v356 = vpop.f32.mrb[0].mxu0
    %v357 = vadd.f32 0.0, %v356
    %v358 = vpop.f32.mrb[0].mxu0
    %359 = vdwg.mxu0
    %v360 = vld [vmem:[%s3] sm:$0xff]
    %v361 = vld [vmem:[%s3 + $0x8] sm:$0xff]
    %v362 = vld [vmem:[%s3 + $0x10] sm:$0xff]
    %v363 = vld [vmem:[%s3 + $0x18] sm:$0xff]
    %v364 = vld [vmem:[%s3 + $0x20] sm:$0xff]
    %v365 = vld [vmem:[%s3 + $0x28] sm:$0xff]
    %v366 = vld [vmem:[%s3 + $0x30] sm:$0xff]
    %v367 = vld [vmem:[%s3 + $0x38] sm:$0xff]
    %v368 = vld [vmem:[%s3 + $0x40] sm:$0xff]
    %v369 = vld [vmem:[%s3 + $0x48] sm:$0xff]
    %v370 = vld [vmem:[%s3 + $0x50] sm:$0xff]
    %v371 = vld [vmem:[%s3 + $0x58] sm:$0xff]
    %v372 = vld [vmem:[%s3 + $0x60] sm:$0xff]
    %v373 = vld [vmem:[%s3 + $0x68] sm:$0xff]
    %v374 = vld [vmem:[%s3 + $0x70] sm:$0xff]
    %v375 = vld [vmem:[%s3 + $0x78] sm:$0xff]
    %v376 = vld [vmem:[%s4] sm:$0xff]
    %v377 = vld [vmem:[%s4 + $0x8] sm:$0xff]
    %v378 = vld [vmem:[%s4 + $0x10] sm:$0xff]
    %v379 = vld [vmem:[%s4 + $0x18] sm:$0xff]
    %v380 = vld [vmem:[%s4 + $0x20] sm:$0xff]
    %v381 = vld [vmem:[%s4 + $0x28] sm:$0xff]
    %v382 = vld [vmem:[%s4 + $0x30] sm:$0xff]
    %v383 = vld [vmem:[%s4 + $0x38] sm:$0xff]
    %v384 = vld [vmem:[%s4 + $0x40] sm:$0xff]
    %v385 = vld [vmem:[%s4 + $0x48] sm:$0xff]
    %v386 = vld [vmem:[%s4 + $0x50] sm:$0xff]
    %v387 = vld [vmem:[%s4 + $0x58] sm:$0xff]
    %v388 = vld [vmem:[%s4 + $0x60] sm:$0xff]
    %v389 = vld [vmem:[%s4 + $0x68] sm:$0xff]
    %v390 = vld [vmem:[%s4 + $0x70] sm:$0xff]
    %v391 = vld [vmem:[%s4 + $0x78] sm:$0xff]
    %v393 = vsel %vm214, %v360, 0
    %v396 = vsel %vm214, %v361, 0
    %v399 = vsel %vm214, %v362, 0
    %v402 = vsel %vm214, %v363, 0
    %v405 = vsel %vm214, %v364, 0
    %v408 = vsel %vm214, %v365, 0
    %v411 = vsel %vm214, %v366, 0
    %v414 = vsel %vm214, %v367, 0
    %v417 = vsel %vm214, %v368, 0
    %v420 = vsel %vm214, %v369, 0
    %v423 = vsel %vm214, %v370, 0
    %v426 = vsel %vm214, %v371, 0
    %v429 = vsel %vm214, %v372, 0
    %v432 = vsel %vm214, %v373, 0
    %v435 = vsel %vm214, %v374, 0
    %v438 = vsel %vm214, %v375, 0
    %v441 = vsel %vm214, %v376, 0
    %v444 = vsel %vm214, %v377, 0
    %v447 = vsel %vm214, %v378, 0
    %v450 = vsel %vm214, %v379, 0
    %v453 = vsel %vm214, %v380, 0
    %v456 = vsel %vm214, %v381, 0
    %v459 = vsel %vm214, %v382, 0
    %v462 = vsel %vm214, %v383, 0
    %v465 = vsel %vm214, %v384, 0
    %v468 = vsel %vm214, %v385, 0
    %v471 = vsel %vm214, %v386, 0
    %v474 = vsel %vm214, %v387, 0
    %v477 = vsel %vm214, %v388, 0
    %v480 = vsel %vm214, %v389, 0
    %v483 = vsel %vm214, %v390, 0
    %v486 = vsel %vm214, %v391, 0
    %488 = vmatprep.subr.mxu0 0.0
    %489 = vmatpush1.xpose.msra.mxu0 %v441
    %490 = vmatprep.subr.mxu0 0.0
    %491 = vmatpush1.xpose.msra.mxu0 %v444
    %492 = vmatprep.subr.mxu0 0.0
    %493 = vmatpush1.xpose.msra.mxu0 %v447
    %494 = vmatprep.subr.mxu0 0.0
    %495 = vmatpush1.xpose.msra.mxu0 %v450
    %496 = vmatprep.subr.mxu0 0.0
    %497 = vmatpush1.xpose.msra.mxu0 %v453
    %498 = vmatprep.subr.mxu0 0.0
    %499 = vmatpush1.xpose.msra.mxu0 %v456
    %500 = vmatprep.subr.mxu0 0.0
    %501 = vmatpush1.xpose.msra.mxu0 %v459
    %502 = vmatprep.subr.mxu0 0.0
    %503 = vmatpush1.xpose.msra.mxu0 %v462
    %504 = vmatprep.subr.mxu0 0.0
    %505 = vmatpush1.xpose.msra.mxu0 %v465
    %506 = vmatprep.subr.mxu0 0.0
    %507 = vmatpush1.xpose.msra.mxu0 %v468
    %508 = vmatprep.subr.mxu0 0.0
    %509 = vmatpush1.xpose.msra.mxu0 %v471
    %510 = vmatprep.subr.mxu0 0.0
    %511 = vmatpush1.xpose.msra.mxu0 %v474
    %512 = vmatprep.subr.mxu0 0.0
    %513 = vmatpush1.xpose.msra.mxu0 %v477
    %514 = vmatprep.subr.mxu0 0.0
    %515 = vmatpush1.xpose.msra.mxu0 %v480
    %516 = vmatprep.subr.mxu0 0.0
    %517 = vmatpush1.xpose.msra.mxu0 %v483
    %518 = vmatprep.subr.mxu0 0.0
    %519 = vmatpush1.xpose.msra.mxu0 %v486
    %520 = vmatprep.subr.mxu0 0.0
    %521 = vmatpush1.xpose.msra.mxu0 0.0
    %522 = vmatprep.subr.mxu0 0.0
    %523 = vmatpush1.xpose.msra.mxu0 0.0
    %524 = vmatprep.subr.mxu0 0.0
    %525 = vmatpush1.xpose.msra.mxu0 0.0
    %526 = vmatprep.subr.mxu0 0.0
    %527 = vmatpush1.xpose.msra.mxu0 0.0
    %528 = vmatprep.subr.mxu0 0.0
    %529 = vmatpush1.xpose.msra.mxu0 0.0
    %530 = vmatprep.subr.mxu0 0.0
    %531 = vmatpush1.xpose.msra.mxu0 0.0
    %532 = vmatprep.subr.mxu0 0.0
    %533 = vmatpush1.xpose.msra.mxu0 0.0
    %534 = vmatprep.subr.mxu0 0.0
    %535 = vmatpush1.xpose.msra.mxu0 0.0
    %536 = vmatprep.subr.mxu0 0.0
    %537 = vmatpush1.xpose.msra.mxu0 0.0
    %538 = vmatprep.subr.mxu0 0.0
    %539 = vmatpush1.xpose.msra.mxu0 0.0
    %540 = vmatprep.subr.mxu0 0.0
    %541 = vmatpush1.xpose.msra.mxu0 0.0
    %542 = vmatprep.subr.mxu0 0.0
    %543 = vmatpush1.xpose.msra.mxu0 0.0
    %544 = vmatprep.subr.mxu0 0.0
    %545 = vmatpush1.xpose.msra.mxu0 0.0
    %546 = vmatprep.subr.mxu0 0.0
    %547 = vmatpush1.xpose.msra.mxu0 0.0
    %548 = vmatprep.subr.mxu0 0.0
    %549 = vmatpush1.xpose.msra.mxu0 0.0
    %550 = vmatprep.subr.mxu0 0.0
    %551 = vmatpush1.xpose.msra.mxu0 0.0
    %552 = vmatprep.mubr.f32.mxu0 0.0
    %553 = vmatmul.mubr.f32.gmra.mrb[0].mxu0 %v393
    %v554 = vpop.f32.mrb[0].mxu0
    %v555 = vadd.f32 0.0, %v554
    %v556 = vpop.f32.mrb[0].mxu0
    %557 = vmatprep.mubr.f32.mxu0 0.0
    %558 = vmatmul.mubr.f32.gmra.mrb[0].mxu0 %v396
    %v559 = vpop.f32.mrb[0].mxu0
    %v560 = vadd.f32 0.0, %v559
    %v561 = vpop.f32.mrb[0].mxu0
    %562 = vmatprep.mubr.f32.mxu0 0.0
    %563 = vmatmul.mubr.f32.gmra.mrb[0].mxu0 %v399
    %v564 = vpop.f32.mrb[0].mxu0
    %v565 = vadd.f32 0.0, %v564
    %v566 = vpop.f32.mrb[0].mxu0
    %567 = vmatprep.mubr.f32.mxu0 0.0
    %568 = vmatmul.mubr.f32.gmra.mrb[0].mxu0 %v402
    %v569 = vpop.f32.mrb[0].mxu0
    %v570 = vadd.f32 0.0, %v569
    %v571 = vpop.f32.mrb[0].mxu0
    %572 = vmatprep.mubr.f32.mxu0 0.0
    %573 = vmatmul.mubr.f32.gmra.mrb[0].mxu0 %v405
    %v574 = vpop.f32.mrb[0].mxu0
    %v575 = vadd.f32 0.0, %v574
    %v576 = vpop.f32.mrb[0].mxu0
    %577 = vmatprep.mubr.f32.mxu0 0.0
    %578 = vmatmul.mubr.f32.gmra.mrb[0].mxu0 %v408
    %v579 = vpop.f32.mrb[0].mxu0
    %v580 = vadd.f32 0.0, %v579
    %v581 = vpop.f32.mrb[0].mxu0
    %582 = vmatprep.mubr.f32.mxu0 0.0
    %583 = vmatmul.mubr.f32.gmra.mrb[0].mxu0 %v411
    %v584 = vpop.f32.mrb[0].mxu0
    %v585 = vadd.f32 0.0, %v584
    %v586 = vpop.f32.mrb[0].mxu0
    %587 = vmatprep.mubr.f32.mxu0 0.0
    %588 = vmatmul.mubr.f32.gmra.mrb[0].mxu0 %v414
    %v589 = vpop.f32.mrb[0].mxu0
    %v590 = vadd.f32 0.0, %v589
    %v591 = vpop.f32.mrb[0].mxu0
    %592 = vmatprep.mubr.f32.mxu0 0.0
    %593 = vmatmul.mubr.f32.gmra.mrb[0].mxu0 %v417
    %v594 = vpop.f32.mrb[0].mxu0
    %v595 = vadd.f32 0.0, %v594
    %v596 = vpop.f32.mrb[0].mxu0
    %597 = vmatprep.mubr.f32.mxu0 0.0
    %598 = vmatmul.mubr.f32.gmra.mrb[0].mxu0 %v420
    %v599 = vpop.f32.mrb[0].mxu0
    %v600 = vadd.f32 0.0, %v599
    %v601 = vpop.f32.mrb[0].mxu0
    %602 = vmatprep.mubr.f32.mxu0 0.0
    %603 = vmatmul.mubr.f32.gmra.mrb[0].mxu0 %v423
    %v604 = vpop.f32.mrb[0].mxu0
    %v605 = vadd.f32 0.0, %v604
    %v606 = vpop.f32.mrb[0].mxu0
    %607 = vmatprep.mubr.f32.mxu0 0.0
    %608 = vmatmul.mubr.f32.gmra.mrb[0].mxu0 %v426
    %v609 = vpop.f32.mrb[0].mxu0
    %v610 = vadd.f32 0.0, %v609
    %v611 = vpop.f32.mrb[0].mxu0
    %612 = vmatprep.mubr.f32.mxu0 0.0
    %613 = vmatmul.mubr.f32.gmra.mrb[0].mxu0 %v429
    %v614 = vpop.f32.mrb[0].mxu0
    %v615 = vadd.f32 0.0, %v614
    %v616 = vpop.f32.mrb[0].mxu0
    %617 = vmatprep.mubr.f32.mxu0 0.0
    %618 = vmatmul.mubr.f32.gmra.mrb[0].mxu0 %v432
    %v619 = vpop.f32.mrb[0].mxu0
    %v620 = vadd.f32 0.0, %v619
    %v621 = vpop.f32.mrb[0].mxu0
    %622 = vmatprep.mubr.f32.mxu0 0.0
    %623 = vmatmul.mubr.f32.gmra.mrb[0].mxu0 %v435
    %v624 = vpop.f32.mrb[0].mxu0
    %v625 = vadd.f32 0.0, %v624
    %v626 = vpop.f32.mrb[0].mxu0
    %627 = vmatprep.mubr.f32.mxu0 0.0
    %628 = vmatmul.mubr.f32.gmra.mrb[0].mxu0 %v438
    %v629 = vpop.f32.mrb[0].mxu0
    %v630 = vadd.f32 0.0, %v629
    %v631 = vpop.f32.mrb[0].mxu0
    %632 = vdwg.mxu0
    %v633 = vmul.f32 %v360, %v360
    %v634 = vmul.f32 %v361, %v361
    %v635 = vmul.f32 %v362, %v362
    %v636 = vmul.f32 %v363, %v363
    %v637 = vmul.f32 %v364, %v364
    %v638 = vmul.f32 %v365, %v365
    %v639 = vmul.f32 %v366, %v366
    %v640 = vmul.f32 %v367, %v367
    %v641 = vmul.f32 %v368, %v368
    %v642 = vmul.f32 %v369, %v369
    %v643 = vmul.f32 %v370, %v370
    %v644 = vmul.f32 %v371, %v371
    %v645 = vmul.f32 %v372, %v372
    %v646 = vmul.f32 %v373, %v373
    %v647 = vmul.f32 %v374, %v374
    %v648 = vmul.f32 %v375, %v375
    %v649 = vsel %vm214, %v633, 0.0
    %650 = vadd.xlane.f32.xlu0 %v649
    %v651 = vpop.xlane.xlu0 %650
    %v652 = vsel %vm214, %v634, 0.0
    %653 = vadd.xlane.f32.xlu0 %v652
    %v654 = vpop.xlane.xlu0 %653
    %v655 = vsel %vm214, %v635, 0.0
    %656 = vadd.xlane.f32.xlu0 %v655
    %v657 = vpop.xlane.xlu0 %656
    %v658 = vsel %vm214, %v636, 0.0
    %659 = vadd.xlane.f32.xlu0 %v658
    %v660 = vpop.xlane.xlu0 %659
    %v661 = vsel %vm214, %v637, 0.0
    %662 = vadd.xlane.f32.xlu0 %v661
    %v663 = vpop.xlane.xlu0 %662
    %v664 = vsel %vm214, %v638, 0.0
    %665 = vadd.xlane.f32.xlu0 %v664
    %v666 = vpop.xlane.xlu0 %665
    %v667 = vsel %vm214, %v639, 0.0
    %668 = vadd.xlane.f32.xlu0 %v667
    %v669 = vpop.xlane.xlu0 %668
    %v670 = vsel %vm214, %v640, 0.0
    %671 = vadd.xlane.f32.xlu0 %v670
    %v672 = vpop.xlane.xlu0 %671
    %v673 = vsel %vm214, %v641, 0.0
    %674 = vadd.xlane.f32.xlu0 %v673
    %v675 = vpop.xlane.xlu0 %674
    %v676 = vsel %vm214, %v642, 0.0
    %677 = vadd.xlane.f32.xlu0 %v676
    %v678 = vpop.xlane.xlu0 %677
    %v679 = vsel %vm214, %v643, 0.0
    %680 = vadd.xlane.f32.xlu0 %v679
    %v681 = vpop.xlane.xlu0 %680
    %v682 = vsel %vm214, %v644, 0.0
    %683 = vadd.xlane.f32.xlu0 %v682
    %v684 = vpop.xlane.xlu0 %683
    %v685 = vsel %vm214, %v645, 0.0
    %686 = vadd.xlane.f32.xlu0 %v685
    %v687 = vpop.xlane.xlu0 %686
    %v688 = vsel %vm214, %v646, 0.0
    %689 = vadd.xlane.f32.xlu0 %v688
    %v690 = vpop.xlane.xlu0 %689
    %v691 = vsel %vm214, %v647, 0.0
    %692 = vadd.xlane.f32.xlu0 %v691
    %v693 = vpop.xlane.xlu0 %692
    %v694 = vsel %vm214, %v648, 0.0
    %695 = vadd.xlane.f32.xlu0 %v694
    %v696 = vpop.xlane.xlu0 %695
    %v697 = vld [vmem:[%s5] sm:$0x1]
    %v699 = vlaneseq
    %v700 = vshrl.u32 %v699, 7
    %v701 = vsub.s32 0, %v700
    %v702 = vrot.slane %v697, %v701
    %v704 = vadd.f32 %v651, %v702
    %v705 = vadd.f32 %v654, %v702
    %v706 = vadd.f32 %v657, %v702
    %v707 = vadd.f32 %v660, %v702
    %v708 = vadd.f32 %v663, %v702
    %v709 = vadd.f32 %v666, %v702
    %v710 = vadd.f32 %v669, %v702
    %v711 = vadd.f32 %v672, %v702
    %v712 = vadd.f32 %v675, %v702
    %v713 = vadd.f32 %v678, %v702
    %v714 = vadd.f32 %v681, %v702
    %v715 = vadd.f32 %v684, %v702
    %v716 = vadd.f32 %v687, %v702
    %v717 = vadd.f32 %v690, %v702
    %v718 = vadd.f32 %v693, %v702
    %v719 = vadd.f32 %v696, %v702
    %v720 = vmul.f32 %v555, 2.0
    %v721 = vmul.f32 %v560, 2.0
    %v722 = vmul.f32 %v565, 2.0
    %v723 = vmul.f32 %v570, 2.0
    %v724 = vmul.f32 %v575, 2.0
    %v725 = vmul.f32 %v580, 2.0
    %v726 = vmul.f32 %v585, 2.0
    %v727 = vmul.f32 %v590, 2.0
    %v728 = vmul.f32 %v595, 2.0
    %v729 = vmul.f32 %v600, 2.0
    %v730 = vmul.f32 %v605, 2.0
    %v731 = vmul.f32 %v610, 2.0
    %v732 = vmul.f32 %v615, 2.0
    %v733 = vmul.f32 %v620, 2.0
    %v734 = vmul.f32 %v625, 2.0
    %v735 = vmul.f32 %v630, 2.0
    %v736 = vsub.f32 %v704, %v720
    %v737 = vsub.f32 %v705, %v721
    %v738 = vsub.f32 %v706, %v722
    %v739 = vsub.f32 %v707, %v723
    %v740 = vsub.f32 %v708, %v724
    %v741 = vsub.f32 %v709, %v725
    %v742 = vsub.f32 %v710, %v726
    %v743 = vsub.f32 %v711, %v727
    %v744 = vsub.f32 %v712, %v728
    %v745 = vsub.f32 %v713, %v729
    %v746 = vsub.f32 %v714, %v730
    %v747 = vsub.f32 %v715, %v731
    %v748 = vsub.f32 %v716, %v732
    %v749 = vsub.f32 %v717, %v733
    %v750 = vsub.f32 %v718, %v734
    %v751 = vsub.f32 %v719, %v735
    %v752 = vmax.f32 %v736, 0.0
    %v753 = vmax.f32 %v737, 0.0
    %v754 = vmax.f32 %v738, 0.0
    %v755 = vmax.f32 %v739, 0.0
    %v756 = vmax.f32 %v740, 0.0
    %v757 = vmax.f32 %v741, 0.0
    %v758 = vmax.f32 %v742, 0.0
    %v759 = vmax.f32 %v743, 0.0
    %v760 = vmax.f32 %v744, 0.0
    %v761 = vmax.f32 %v745, 0.0
    %v762 = vmax.f32 %v746, 0.0
    %v763 = vmax.f32 %v747, 0.0
    %v764 = vmax.f32 %v748, 0.0
    %v765 = vmax.f32 %v749, 0.0
    %v766 = vmax.f32 %v750, 0.0
    %v767 = vmax.f32 %v751, 0.0
    %s768 = sld [smem:[#allocation2]]
    %s769 = sld [smem:[#allocation2 + $0x1]]
    %s770 = sld [smem:[#allocation2 + $0x2]]
    %s771 = sld [smem:[#allocation2 + $0x3]]
    %v772 = vstv %s770
    %v773 = vmul.f32 %v772, %v298
    %v774 = vmul.f32 %v772, %v301
    %v775 = vmul.f32 %v772, %v306
    %v776 = vmul.f32 %v772, %v309
    %v777 = vmul.f32 %v772, %v314
    %v778 = vmul.f32 %v772, %v317
    %v779 = vmul.f32 %v772, %v322
    %v780 = vmul.f32 %v772, %v325
    %v781 = vmul.f32 %v772, %v330
    %v782 = vmul.f32 %v772, %v333
    %v783 = vmul.f32 %v772, %v338
    %v784 = vmul.f32 %v772, %v341
    %v785 = vmul.f32 %v772, %v346
    %v786 = vmul.f32 %v772, %v349
    %v787 = vmul.f32 %v772, %v354
    %v788 = vmul.f32 %v772, %v357
    %v789 = vmul.f32 %v773, 1.442695
    %v790 = vpow.pop %v789
    %v791 = vmul.f32 %v774, 1.442695
    %v792 = vpow.pop %v791
    %v793 = vmul.f32 %v775, 1.442695
    %v794 = vpow.pop %v793
    %v795 = vmul.f32 %v776, 1.442695
    %v796 = vpow.pop %v795
    %v797 = vmul.f32 %v777, 1.442695
    %v798 = vpow.pop %v797
    %v799 = vmul.f32 %v778, 1.442695
    %v800 = vpow.pop %v799
    %v801 = vmul.f32 %v779, 1.442695
    %v802 = vpow.pop %v801
    %v803 = vmul.f32 %v780, 1.442695
    %v804 = vpow.pop %v803
    %v805 = vmul.f32 %v781, 1.442695
    %v806 = vpow.pop %v805
    %v807 = vmul.f32 %v782, 1.442695
    %v808 = vpow.pop %v807
    %v809 = vmul.f32 %v783, 1.442695
    %v810 = vpow.pop %v809
    %v811 = vmul.f32 %v784, 1.442695
    %v812 = vpow.pop %v811
    %v813 = vmul.f32 %v785, 1.442695
    %v814 = vpow.pop %v813
    %v815 = vmul.f32 %v786, 1.442695
    %v816 = vpow.pop %v815
    %v817 = vmul.f32 %v787, 1.442695
    %v818 = vpow.pop %v817
    %v819 = vmul.f32 %v788, 1.442695
    %v820 = vpow.pop %v819
    %v821 = vstv %s768
    %v822 = vmul.f32 %v821, %v790
    %v823 = vmul.f32 %v821, %v792
    %v824 = vmul.f32 %v821, %v794
    %v825 = vmul.f32 %v821, %v796
    %v826 = vmul.f32 %v821, %v798
    %v827 = vmul.f32 %v821, %v800
    %v828 = vmul.f32 %v821, %v802
    %v829 = vmul.f32 %v821, %v804
    %v830 = vmul.f32 %v821, %v806
    %v831 = vmul.f32 %v821, %v808
    %v832 = vmul.f32 %v821, %v810
    %v833 = vmul.f32 %v821, %v812
    %v834 = vmul.f32 %v821, %v814
    %v835 = vmul.f32 %v821, %v816
    %v836 = vmul.f32 %v821, %v818
    %v837 = vmul.f32 %v821, %v820
    %v838 = vsub.f32 0.0, %v752
    %v839 = vsub.f32 0.0, %v753
    %v840 = vsub.f32 0.0, %v754
    %v841 = vsub.f32 0.0, %v755
    %v842 = vsub.f32 0.0, %v756
    %v843 = vsub.f32 0.0, %v757
    %v844 = vsub.f32 0.0, %v758
    %v845 = vsub.f32 0.0, %v759
    %v846 = vsub.f32 0.0, %v760
    %v847 = vsub.f32 0.0, %v761
    %v848 = vsub.f32 0.0, %v762
    %v849 = vsub.f32 0.0, %v763
    %v850 = vsub.f32 0.0, %v764
    %v851 = vsub.f32 0.0, %v765
    %v852 = vsub.f32 0.0, %v766
    %v853 = vsub.f32 0.0, %v767
    %v854 = vstv %s771
    %v855 = vmul.f32 %v838, %v854
    %v856 = vmul.f32 %v839, %v854
    %v857 = vmul.f32 %v840, %v854
    %v858 = vmul.f32 %v841, %v854
    %v859 = vmul.f32 %v842, %v854
    %v860 = vmul.f32 %v843, %v854
    %v861 = vmul.f32 %v844, %v854
    %v862 = vmul.f32 %v845, %v854
    %v863 = vmul.f32 %v846, %v854
    %v864 = vmul.f32 %v847, %v854
    %v865 = vmul.f32 %v848, %v854
    %v866 = vmul.f32 %v849, %v854
    %v867 = vmul.f32 %v850, %v854
    %v868 = vmul.f32 %v851, %v854
    %v869 = vmul.f32 %v852, %v854
    %v870 = vmul.f32 %v853, %v854
    %v871 = vmul.f32 %v855, 1.442695
    %v872 = vpow.pop %v871
    %v873 = vmul.f32 %v856, 1.442695
    %v874 = vpow.pop %v873
    %v875 = vmul.f32 %v857, 1.442695
    %v876 = vpow.pop %v875
    %v877 = vmul.f32 %v858, 1.442695
    %v878 = vpow.pop %v877
    %v879 = vmul.f32 %v859, 1.442695
    %v880 = vpow.pop %v879
    %v881 = vmul.f32 %v860, 1.442695
    %v882 = vpow.pop %v881
    %v883 = vmul.f32 %v861, 1.442695
    %v884 = vpow.pop %v883
    %v885 = vmul.f32 %v862, 1.442695
    %v886 = vpow.pop %v885
    %v887 = vmul.f32 %v863, 1.442695
    %v888 = vpow.pop %v887
    %v889 = vmul.f32 %v864, 1.442695
    %v890 = vpow.pop %v889
    %v891 = vmul.f32 %v865, 1.442695
    %v892 = vpow.pop %v891
    %v893 = vmul.f32 %v866, 1.442695
    %v894 = vpow.pop %v893
    %v895 = vmul.f32 %v867, 1.442695
    %v896 = vpow.pop %v895
    %v897 = vmul.f32 %v868, 1.442695
    %v898 = vpow.pop %v897
    %v899 = vmul.f32 %v869, 1.442695
    %v900 = vpow.pop %v899
    %v901 = vmul.f32 %v870, 1.442695
    %v902 = vpow.pop %v901
    %v903 = vstv %s769
    %v904 = vmul.f32 %v903, %v872
    %v905 = vmul.f32 %v903, %v874
    %v906 = vmul.f32 %v903, %v876
    %v907 = vmul.f32 %v903, %v878
    %v908 = vmul.f32 %v903, %v880
    %v909 = vmul.f32 %v903, %v882
    %v910 = vmul.f32 %v903, %v884
    %v911 = vmul.f32 %v903, %v886
    %v912 = vmul.f32 %v903, %v888
    %v913 = vmul.f32 %v903, %v890
    %v914 = vmul.f32 %v903, %v892
    %v915 = vmul.f32 %v903, %v894
    %v916 = vmul.f32 %v903, %v896
    %v917 = vmul.f32 %v903, %v898
    %v918 = vmul.f32 %v903, %v900
    %v919 = vmul.f32 %v903, %v902
    %v920 = vadd.f32 %v822, %v904
    %v921 = vadd.f32 %v823, %v905
    %v922 = vadd.f32 %v824, %v906
    %v923 = vadd.f32 %v825, %v907
    %v924 = vadd.f32 %v826, %v908
    %v925 = vadd.f32 %v827, %v909
    %v926 = vadd.f32 %v828, %v910
    %v927 = vadd.f32 %v829, %v911
    %v928 = vadd.f32 %v830, %v912
    %v929 = vadd.f32 %v831, %v913
    %v930 = vadd.f32 %v832, %v914
    %v931 = vadd.f32 %v833, %v915
    %v932 = vadd.f32 %v834, %v916
    %v933 = vadd.f32 %v835, %v917
    %v934 = vadd.f32 %v836, %v918
    %v935 = vadd.f32 %v837, %v919
    %936 = vst [vmem:[#allocation5] sm:$0xff] %v920
    %937 = vst [vmem:[#allocation5 + $0x8] sm:$0xff] %v921
    %938 = vst [vmem:[#allocation5 + $0x10] sm:$0xff] %v922
    %939 = vst [vmem:[#allocation5 + $0x18] sm:$0xff] %v923
    %940 = vst [vmem:[#allocation5 + $0x20] sm:$0xff] %v924
    %941 = vst [vmem:[#allocation5 + $0x28] sm:$0xff] %v925
    %942 = vst [vmem:[#allocation5 + $0x30] sm:$0xff] %v926
    %943 = vst [vmem:[#allocation5 + $0x38] sm:$0xff] %v927
    %944 = vst [vmem:[#allocation5 + $0x40] sm:$0xff] %v928
    %945 = vst [vmem:[#allocation5 + $0x48] sm:$0xff] %v929
    %946 = vst [vmem:[#allocation5 + $0x50] sm:$0xff] %v930
    %947 = vst [vmem:[#allocation5 + $0x58] sm:$0xff] %v931
    %948 = vst [vmem:[#allocation5 + $0x60] sm:$0xff] %v932
    %949 = vst [vmem:[#allocation5 + $0x68] sm:$0xff] %v933
    %950 = vst [vmem:[#allocation5 + $0x70] sm:$0xff] %v934
    %951 = vst [vmem:[#allocation5 + $0x78] sm:$0xff] %v935
    // Predicated region
    $region30: #{tpu_custom_call.1} parent=1 // pred_check
      _
    $region31: #{tpu_custom_call.1} parent=1 // pred_check_branch
      %953 = sbr.rel (0) target = $region33
    $region32: #{tpu_custom_call.1} parent=1 // pred_region
      %s955 = ssub.s32 2048, 2048
      %956 = vsyncadd [#allocation3], %s955
      %s957 = sshll.u32 [#allocation5], 4
      %s958 = int_to_ptr.vmem [resolvable:$true] %s957
      %963 = dma.vmem_to_hbm [thread:$0]  %s958, 2048, %s6, [#allocation3], 128, 128, 8
    $region33: #{tpu_custom_call.1} parent=1 // pred_fallthru
      _
    // Predicated region
    $region34: #{tpu_custom_call.1} parent=1 // pred_check
      _
    $region35: #{tpu_custom_call.1} parent=1 // pred_check_branch
      %965 = sbr.rel (0) target = $region37
    $region36: #{tpu_custom_call.1} parent=1 // pred_region
      %966 = dma.done [#allocation3], 2048
    $region37: #{tpu_custom_call.1} parent=1 // pred_fallthru
      _
    %967 = vsyncpa [#allocation3], 1
    %968 = vsyncpa [#allocation4], 1

</llo_original>
